<compile_context>
chip_gen: v6e
topology: v6e:2x2x1
jax: 0.10.0
libtpu: 0.0.40
codegen_flags: <defaults>
</compile_context>

<pallas_src>
import functools

import jax
import jax.numpy as jnp
from jax.experimental import pallas as pl
from jax.experimental.pallas import tpu as pltpu

_LANES = 128


def _gloss_kernel(x_ref, o_ref, acc_ref, *, inv_n):
    """Tiled sum reduction; finalizes 1 - sum * inv_n into an SMEM scalar."""
    i = pl.program_id(0)

    @pl.when(i == 0)
    def _init():
        acc_ref[...] = jnp.zeros_like(acc_ref)

    # Per-tile partial sum: reduce over sublanes only, keep lanes resident.
    tile = x_ref[...].astype(jnp.float32)                    # (tm, 128)
    acc_ref[...] += jnp.sum(tile, axis=0, keepdims=True)     # (1, 128)

    @pl.when(i == pl.num_programs(0) - 1)
    def _finalize():
        total = jnp.sum(acc_ref[...])                        # cross-lane, once
        o_ref[0] = jnp.float32(1.0) - total * jnp.float32(inv_n)


def gloss(neg, *, block_rows=1024):
    """1.0 - mean(neg), computed with a tiled Pallas TPU reduction kernel."""
    if not jnp.issubdtype(neg.dtype, jnp.floating):
        neg = neg.astype(jnp.float32)
    x = neg.reshape(-1)
    n = x.size

    rows = pl.cdiv(n, _LANES)
    # Row-tile size: multiple of 8 (sublane), no larger than needed.
    tm = max(8, min(int(block_rows), ((rows + 7) // 8) * 8))
    rows_p = pl.cdiv(rows, tm) * tm
    pad = rows_p * _LANES - n
    if pad:
        x = jnp.concatenate([x, jnp.zeros((pad,), x.dtype)])
    x2 = x.reshape(rows_p, _LANES)

    out = pl.pallas_call(
        functools.partial(_gloss_kernel, inv_n=1.0 / float(n)),
        out_shape=jax.ShapeDtypeStruct((1,), jnp.float32),
        grid_spec=pltpu.PrefetchScalarGridSpec(
            num_scalar_prefetch=0,
            grid=(rows_p // tm,),
            in_specs=[pl.BlockSpec((tm, _LANES), lambda i: (i, 0))],
            out_specs=pl.BlockSpec(memory_space=pltpu.MemorySpace.SMEM),
            scratch_shapes=[pltpu.VMEM((1, _LANES), jnp.float32)],
        ),
        compiler_params=pltpu.CompilerParams(
            dimension_semantics=("arbitrary",),   # reduction axis w/ accumulator
        ),
    )(x2)
    return out[0]


if __name__ == "__main__":
    key = jax.random.PRNGKey(0)
    # `neg` is the discriminator output on generated samples; pick a small
    # feature-map-like shape.
    neg = jax.random.uniform(key, (2, 4, 16, 16), jnp.float32)

    # Small block_rows so the demo exercises a multi-step grid + accumulator.
    loss_fn = jax.jit(functools.partial(gloss, block_rows=8))
    loss = loss_fn(neg)
    jax.block_until_ready(loss)

    ref = 1.0 - jnp.mean(neg.astype(jnp.float32))
    assert loss.shape == () and bool(jnp.isfinite(loss))
    assert jnp.allclose(loss, ref, atol=1e-5, rtol=1e-5), (loss, ref)
    print("KERNEL_OK")
</pallas_src>

<mosaic_0001>
module attributes {stable_mosaic.version = 11 : i64} {
  func.func @_gloss_kernel(%arg0: i32, %arg1: memref<8x128xf32, #tpu.memory_space<vmem>>, %arg2: memref<1xf32, #tpu.memory_space<smem>>, %arg3: memref<1x128xf32, #tpu.memory_space<vmem>>) attributes {dimension_semantics = [#tpu.dimension_semantics<arbitrary>], iteration_bounds = array<i64: 2>, scalar_prefetch = 0 : i64, scratch_operands = 1 : i64, tpu.core_type = #tpu.core_type<tc>, window_params = [{transform_indices = @transform_0, window_bounds = array<i64: 8, 128>}, {transform_indices = @transform_1, window_bounds = array<i64: 1>}]} {
    %c0_i32 = arith.constant 0 : i32
    %0 = arith.cmpi eq, %arg0, %c0_i32 : i32
    %1 = arith.extui %0 : i1 to i32
    %c0_i32_0 = arith.constant 0 : i32
    %2 = arith.cmpi ne, %1, %c0_i32_0 : i32
    scf.if %2 {
      %cst_7 = arith.constant 0.000000e+00 : f32
      %12 = vector.broadcast %cst_7 : f32 to vector<1x128xf32>
      %c0_8 = arith.constant 0 : index
      %c0_9 = arith.constant 0 : index
      %13 = vector.load %arg3[%c0_8, %c0_9] : memref<1x128xf32, #tpu.memory_space<vmem>>, vector<1x128xf32>
      tpu.vector_store %arg3[%c0_8, %c0_9], %12 {strides = array<i32>} : memref<1x128xf32, #tpu.memory_space<vmem>>, vector<1x128xf32>,
    } else {
    }
    %c0 = arith.constant 0 : index
    %c0_1 = arith.constant 0 : index
    %3 = vector.load %arg1[%c0, %c0_1] : memref<8x128xf32, #tpu.memory_space<vmem>>, vector<8x128xf32>
    %c0_2 = arith.constant 0 : index
    %c0_3 = arith.constant 0 : index
    %4 = vector.load %arg3[%c0_2, %c0_3] : memref<1x128xf32, #tpu.memory_space<vmem>>, vector<1x128xf32>
    %cst = arith.constant dense<0.000000e+00> : vector<128xf32>
    %5 = vector.multi_reduction <add>, %3, %cst [0] : vector<8x128xf32> to vector<128xf32>
    %6 = vector.shape_cast %5 : vector<128xf32> to vector<1x128xf32>
    %7 = arith.addf %4, %6 : vector<1x128xf32>
    %c0_4 = arith.constant 0 : index
    %c0_5 = arith.constant 0 : index
    %8 = vector.load %arg3[%c0_4, %c0_5] : memref<1x128xf32, #tpu.memory_space<vmem>>, vector<1x128xf32>
    tpu.vector_store %arg3[%c0_4, %c0_5], %7 {strides = array<i32>} : memref<1x128xf32, #tpu.memory_space<vmem>>, vector<1x128xf32>,
    %c1_i32 = arith.constant 1 : i32
    %9 = arith.cmpi eq, %arg0, %c1_i32 : i32
    %10 = arith.extui %9 : i1 to i32
    %c0_i32_6 = arith.constant 0 : i32
    %11 = arith.cmpi ne, %10, %c0_i32_6 : i32
    scf.if %11 {
      %c0_7 = arith.constant 0 : index
      %c0_8 = arith.constant 0 : index
      %12 = vector.load %arg3[%c0_7, %c0_8] : memref<1x128xf32, #tpu.memory_space<vmem>>, vector<1x128xf32>
      %13 = vector.shape_cast %12 : vector<1x128xf32> to vector<1x1x128xf32>
      %cst_9 = arith.constant dense<0.000000e+00> : vector<1xf32>
      %14 = vector.multi_reduction <add>, %13, %cst_9 [1, 2] : vector<1x1x128xf32> to vector<1xf32>
      %15 = vector.shape_cast %14 : vector<1xf32> to vector<1x1x1xf32>
      %16 = vector.extract %15[0, 0, 0] : f32 from vector<1x1x1xf32>
      %cst_10 = arith.constant 4.8828125E-4 : f32
      %17 = arith.mulf %16, %cst_10 : f32
      %cst_11 = arith.constant 1.000000e+00 : f32
      %18 = arith.subf %cst_11, %17 : f32
      %c0_12 = arith.constant 0 : index
      %19 = memref.load %arg2[%c0_12] : memref<1xf32, #tpu.memory_space<smem>>
      memref.store %18, %arg2[%c0_12] : memref<1xf32, #tpu.memory_space<smem>>
    } else {
    }
    return
  }
  func.func @transform_0(%arg0: i32) -> (i32, i32) {
    %c0_i32 = arith.constant 0 : i32
    %c0_i32_0 = arith.constant 0 : i32
    return %arg0, %c0_i32 : i32, i32
  }
  func.func @transform_1(%arg0: i32) -> i32 {
    %c0_i32 = arith.constant 0 : i32
    %c0_i32_0 = arith.constant 0 : i32
    return %c0_i32 : i32
  }
}

</mosaic_0001>

<llo_original>
// kernel: gloss.1
$region0: #{gloss.1}
  #allocation0 [shape = 'u32[]', space=smem, size = 0x4, offset = 0x4, fixed_abs, tag = 'smem constant byte address 0x4 - core index']
  #allocation1 [shape = 'u32[144,128]{1,0:T(1,128)}', space=vmem, size = 0x12000, scoped, tag = 'internal scratch']
  #allocation2 [shape = 'f32[1,128]{1,0:T(1,128)}', space=vmem, size = 0x200, scoped, tag = 'scratch operand']
  %s0 = inlined_call_operand.vmem [shape: f32[16,128], index: 0, kind: input, shape index: {}]
  %s1 = inlined_call_operand.hbm [shape: f32[1], index: 1, kind: output, shape index: {}]
  %s2 = sld [smem:[#allocation0]]
  $region45: #{gloss.1} parent=0
    _
  %s4 = ssub.s32 1, %s2
  %s5 = scalar_select 0, %s4, %s2
  $region1: #{gloss.1} parent=0
    #allocation3 [shape = 'u8[512]{0}', space=smem, size = 0x200, scoped, tag = 'output window, operand 0, single buffered']
    #allocation4 [shape = 's32[2]{0}', space=sflag, size = 0x8, scoped, tag = 'scoped memory for gloss.1']
    %6 = vsyncpa [#allocation4], 0
    loop: start=0, step=1, limit=4
    $region2: #{gloss.1} parent=1 // loop_pre_header
      _
    $region3: #{gloss.1} parent=1 // loop_header
      %s8 = sphi 0, %s12
      %p9 = scmp.ge.s32.totalorder %s8, 4
      %s18 = sphi 0, %s20
      %s21 = sphi 0, %s18
      %s22 = sphi 0, %s21
      %s38 = sphi 0, %s22
      %s42 = sphi 0, %s42
      %s44 = sphi 0, %s42
      %s45 = sphi 0, %s44
      %s59 = sphi 0, %s45
    $region4: #{gloss.1} parent=1 // loop_header_branch
      %11 = sbr.rel (%p9) target = $region8
    $region5: #{gloss.1} parent=1 // loop_body
      %s13 = ssub.s32 %s8, 1
      %s14 = ssub.s32 %s8, 2
      %s15 = sadd.s32 %s8, 1
      %s16 = ssub.s32 %s8, %s15
      %p17 = scmp.eq.s32.totalorder %s16, 0
      %s19 = sadd.s32 %s18, 1
      %s20 = scalar_select %p17, %s18, %s19
      %p23 = pneg %p17
      %p24 = scmp.eq.s32.totalorder %s8, 1
      %p25 = por %p23, %p24
      %p26 = scmp.ne.s32.totalorder %s18, %s21
      %p27 = scmp.eq.s32.totalorder %s8, 0
      %p28 = por %p26, %p27
      %p29 = scmp.ne.s32.totalorder %s18, %s21
      %p30 = scmp.eq.s32.totalorder %s13, 1
      %p31 = por %p29, %p30
      %p32 = scmp.ne.s32.totalorder %s21, %s22
      %p33 = scmp.eq.s32.totalorder %s13, 0
      %p34 = por %p32, %p33
      %p35 = scmp.ne.s32.totalorder %s21, %s22
      %p36 = scmp.eq.s32.totalorder %s14, 1
      %p37 = por %p35, %p36
      %p39 = scmp.ne.s32.totalorder %s22, %s38
      %p40 = scmp.eq.s32.totalorder %s14, 0
      %p41 = por %p39, %p40
      %s43 = sadd.s32 %s42, 1
      %p46 = scmp.eq.s32.totalorder %s8, 1
      %p47 = scmp.ne.s32.totalorder %s42, %s44
      %p48 = scmp.eq.s32.totalorder %s8, 0
      %p49 = por %p47, %p48
      %p50 = scmp.ne.s32.totalorder %s42, %s44
      %p51 = scmp.eq.s32.totalorder %s13, 1
      %p52 = por %p50, %p51
      %p53 = scmp.ne.s32.totalorder %s44, %s45
      %p54 = scmp.eq.s32.totalorder %s13, 0
      %p55 = por %p53, %p54
      %p56 = scmp.ne.s32.totalorder %s44, %s45
      %p57 = scmp.eq.s32.totalorder %s14, 1
      %p58 = por %p56, %p57
      %p60 = scmp.ne.s32.totalorder %s45, %s59
      %p61 = scmp.eq.s32.totalorder %s14, 0
      %p62 = por %p60, %p61
      %p63 = scmp.le.s32.totalorder 1, %s8
      %p64 = scmp.lt.s32.totalorder %s8, 3
      %p65 = pnand %p63, %p64
      %p66 = pneg %p65
      // Predicated region
      $region9: #{gloss.1} parent=5 // pred_check
        _
      $region10: #{gloss.1} parent=5 // pred_check_branch
        %68 = sbr.rel (%p65) target = $region12
      $region11: #{gloss.1} parent=5 // pred_region
        %s69 = ssub.s32 %s8, 1
      $region12: #{gloss.1} parent=5 // pred_fallthru
        _
      %p70 = scmp.lt.s32.totalorder %s8, 2
      // Predicated region
      $region13: #{gloss.1} parent=5 // pred_check
        %p71 = pneg %p70
      $region14: #{gloss.1} parent=5 // pred_check_branch
        %73 = sbr.rel (%p71) target = $region16
      $region15: #{gloss.1} parent=5 // pred_region
        // Predicated region
        $region17: #{gloss.1} parent=15 // pred_check
          %p74 = pneg %p28
        $region18: #{gloss.1} parent=15 // pred_check_branch
          %76 = sbr.rel (%p74) target = $region20
        $region19: #{gloss.1} parent=15 // pred_region
          %p77 = scmp.lt.s32.totalorder %s8, 1
          %s78 = scalar_select %p77, %s8, 1
          %s79 = smul.addr %s78, 8
          %s80 = scalar_lea.vmem %s0, %s79
        $region20: #{gloss.1} parent=15 // pred_fallthru
          _
      $region16: #{gloss.1} parent=5 // pred_fallthru
        _
      %p81 = scmp.le.s32.totalorder 1, %s8
      %p82 = scmp.lt.s32.totalorder %s8, 3
      %p83 = pnand %p81, %p82
      %p84 = pneg %p83
      // Predicated region
      $region21: #{gloss.1} parent=5 // pred_check
        _
      $region22: #{gloss.1} parent=5 // pred_check_branch
        %86 = sbr.rel (%p83) target = $region24
      $region23: #{gloss.1} parent=5 // pred_region
        %s87 = ssub.s32 %s8, 1
        %p88 = scmp.lt.s32.totalorder %s13, 1
        %s89 = scalar_select %p88, %s13, 1
        %s90 = smul.addr %s89, 8
        %s91 = scalar_lea.vmem %s0, %s90
        %p92 = pneg %p34
        %p93 = pneg %p31
        %p94 = pneg %p55
        %p95 = pneg %p52
        %p96 = scmp.lt.s32.totalorder %s13, 1
        %s97 = scalar_select %p96, %s13, 1
        %s98 = smul.addr %s97, 8
        %s99 = scalar_lea.vmem %s0, %s98
        %p100 = scmp.eq.s32.totalorder %s13, 0
        // Predicated region
        $region25: #{gloss.1} parent=23 // pred_check
          %p101 = pneg %p100
        $region26: #{gloss.1} parent=23 // pred_check_branch
          %103 = sbr.rel (%p101) target = $region28
        $region27: #{gloss.1} parent=23 // pred_region
          %104 = vst [vmem:[#allocation2] sm:$0x1] 0.0
        $region28: #{gloss.1} parent=23 // pred_fallthru
          _
        %v105 = vld [vmem:[%s99] sm:$0xff]
        %v106 = vld [vmem:[#allocation2] sm:$0x1]
        %v107 = vrot.slane %v105, 4
        %v108 = vadd.f32 %v105, %v107
        %v109 = vrot.slane %v108, 2
        %v110 = vadd.f32 %v108, %v109
        %v111 = vrot.slane %v110, 1
        %v112 = vadd.f32 %v110, %v111
        %v113 = vadd.f32 %v106, %v112
        %114 = vst [vmem:[#allocation2] sm:$0x1] %v113
        %p115 = scmp.eq.s32.totalorder %s13, 1
        // Predicated region
        $region29: #{gloss.1} parent=23 // pred_check
          %p116 = pneg %p115
        $region30: #{gloss.1} parent=23 // pred_check_branch
          %118 = sbr.rel (%p116) target = $region32
        $region31: #{gloss.1} parent=23 // pred_region
          %v119 = vld [vmem:[#allocation2] sm:$0x1]
          %vm120 = vcmask 1040384
          %v121 = vsel %vm120, %v119, 0.0
          %122 = vadd.xlane.f32.xlu0 %v121
          %v123 = vpop.xlane.xlu0 %122
          %v124 = vrot.slane %v123, 4
          %v125 = vadd.f32 %v123, %v124
          %v126 = vrot.slane %v125, 2
          %v127 = vadd.f32 %v125, %v126
          %v128 = vrot.slane %v127, 1
          %v129 = vadd.f32 %v127, %v128
          %s130 = vtos %v129
          %s131 = smul.f32 %s130, 0.00048828125
          %s132 = ssub.f32 1.0, %s131
          %s133 = scalar_lea.smem [#allocation3], 0
          %134 = sst [smem:[%s133]] %s132
        $region32: #{gloss.1} parent=23 // pred_fallthru
          _
        // Predicated region
        $region33: #{gloss.1} parent=23 // pred_check
          %p135 = pneg %p52
        $region34: #{gloss.1} parent=23 // pred_check_branch
          %137 = sbr.rel (%p135) target = $region36
        $region35: #{gloss.1} parent=23 // pred_region
          %s139 = ssub.s32 16, 16
          %140 = vsyncadd [#allocation4], %s139
          %143 = dma.smem_to_hbm [#allocation3], 16, %s1, [#allocation4]
        $region36: #{gloss.1} parent=23 // pred_fallthru
          _
        // Predicated region
        $region37: #{gloss.1} parent=23 // pred_check
          %p144 = pneg %p52
        $region38: #{gloss.1} parent=23 // pred_check_branch
          %146 = sbr.rel (%p144) target = $region40
        $region39: #{gloss.1} parent=23 // pred_region
          %147 = dma.done [#allocation4], 16
        $region40: #{gloss.1} parent=23 // pred_fallthru
          _
        %148 = sfence
      $region24: #{gloss.1} parent=5 // pred_fallthru
        _
      %p149 = scmp.le.s32.totalorder 2, %s8
      // Predicated region
      $region41: #{gloss.1} parent=5 // pred_check
        %p150 = pneg %p149
      $region42: #{gloss.1} parent=5 // pred_check_branch
        %152 = sbr.rel (%p150) target = $region44
      $region43: #{gloss.1} parent=5 // pred_region
        %s153 = ssub.s32 %s8, 2
      $region44: #{gloss.1} parent=5 // pred_fallthru
        _
    $region6: #{gloss.1} parent=1 // loop_footer
      %s12 = sadd.s32 1, %s8
    $region7: #{gloss.1} parent=1 // loop_footer_branch
      %7 = sbr.rel target = $region3
    $region8: #{gloss.1} parent=1 // loop_exit
      _
    %154 = vsyncpa [#allocation4], 1
    %s155 = scalar_lea.sflag [#allocation4], 1
    %156 = vsyncpa %s155, 1

</llo_original>
